<compile_context>
chip_gen: v5e
topology: v5e:2x2
jax: 0.10.0
libtpu: 0.0.40
codegen_flags: <defaults>
</compile_context>

<pallas_src>
import functools

import jax
import jax.numpy as jnp
from jax.experimental import pallas as pl
from jax.experimental.pallas import tpu as pltpu


# ----------------------------------------------------------------------------
# Kernels
# ----------------------------------------------------------------------------
def _conv1x1_bn_relu_kernel(x_ref, w_ref, b_ref, o_ref):
    # (TM, Cin) @ (Cin, Cout) on the MXU, f32 accumulation; BN scale folded
    # into w, so only the shift add + ReLU remain in the epilogue.
    y = jnp.dot(x_ref[...], w_ref[...], preferred_element_type=jnp.float32)
    o_ref[...] = jnp.maximum(y + b_ref[...], 0.0).astype(o_ref.dtype)


def _rows(x, start, count, stride):
    # x[start + o*stride] for o in range(count) along axis 0.  Static unroll so
    # only plain static slices are lowered (no strided-slice lowering risk).
    if stride == 1:
        return x[start:start + count]
    return jnp.concatenate([x[start + o * stride][None] for o in range(count)],
                           axis=0)


def _cols(x, count, stride):
    # x[:, wo*stride, :] for wo in range(count) along axis 1 (static unroll).
    if stride == 1:
        return x
    return jnp.concatenate(
        [x[:, wo * stride:wo * stride + 1, :] for wo in range(count)], axis=1)


def _fused_block_kernel(xc_ref, xa_ref, xb_ref, xres_ref,
                        w2_ref, b2_ref, w3_ref, b3_ref, *rest,
                        TH, W, stride, has_down):
    """conv2(3x3,stride,pad=1)+BN+ReLU -> conv3(1x1)+BN -> +residual -> ReLU.

    Grid = (N, Ho // TH).  Each step consumes TH*stride rows of the conv1
    output (plus a 1-row halo above/below, zero-masked at the image border)
    and produces TH*Wo rows of the final block output.
    """
    if has_down:
        wd_ref, bd_ref, out_ref = rest
    else:
        (out_ref,) = rest

    t = pl.program_id(1)
    last_t = pl.num_programs(1) - 1
    p = xc_ref.shape[-1]                    # conv2 channels (planes)
    cdtype = xc_ref.dtype
    Wo = W // stride

    # ---- vertically haloed input tile (zero pad at the image top/bottom) ----
    above = jnp.where(t > 0, xa_ref[0], jnp.zeros((1, W, p), cdtype))
    below = jnp.where(t < last_t, xb_ref[0], jnp.zeros((1, W, p), cdtype))
    x = jnp.concatenate([above, xc_ref[0], below], axis=0)   # (TH*stride+2, W, p)

    # ---- horizontal taps: dx = -1/0/+1 shifts concatenated on the channel
    #      (lane) axis with zero-column edge padding -> K = 3*p per dy matmul.
    zcol = jnp.zeros((x.shape[0], 1, p), cdtype)
    xl = jnp.concatenate([zcol, x[:, :W - 1, :]], axis=1)     # col w-1
    xr = jnp.concatenate([x[:, 1:, :], zcol], axis=1)         # col w+1
    xcat = jnp.concatenate([xl, x, xr], axis=-1)              # (TH*stride+2, W, 3p)

    # ---- conv2: 3 MXU matmuls (one per dy), f32 accumulation ----
    acc = jnp.zeros((TH * W, p), jnp.float32)
    for dy in range(3):
        xdy = _rows(xcat, dy, TH, stride)                     # (TH, W, 3p)
        acc = acc + jnp.dot(xdy.reshape(TH * W, 3 * p), w2_ref[dy],
                            preferred_element_type=jnp.float32)
    y2 = jnp.maximum(acc + b2_ref[...], 0.0)                  # (TH*W, p) f32

    # ---- stride > 1: keep only the strided output columns before conv3 ----
    if stride > 1:
        y2 = _cols(y2.reshape(TH, W, p), Wo, stride).reshape(TH * Wo, p)

    # ---- residual: identity rows, or strided rows/cols for the projection ----
    xres = _cols(_rows(xres_ref[0], 0, TH, stride), Wo, stride)
    res = xres.reshape(TH * Wo, xres_ref.shape[-1])
    if has_down:
        res = jnp.dot(res, wd_ref[...],
                      preferred_element_type=jnp.float32) + bd_ref[...]
    else:
        res = res.astype(jnp.float32)

    # ---- conv3 + BN + residual add + ReLU (all fused, f32 epilogue) ----
    y3 = jnp.dot(y2.astype(cdtype), w3_ref[...],
                 preferred_element_type=jnp.float32)
    out_ref[0] = jnp.maximum(y3 + b3_ref[...] + res, 0.0).astype(out_ref.dtype)


# ----------------------------------------------------------------------------
# pallas_call wrappers
# ----------------------------------------------------------------------------
def _pick_tm(m):
    # Large row tiles (512-1024) get the memory-bound 1x1 matmuls close to the
    # HBM roofline; everything stays well inside the default scoped-VMEM limit.
    for tm in (1024, 512, 256, 128, 64, 32, 16, 8):
        if m >= tm and m % tm == 0:
            return tm
    return m


def _pick_th(ho, wo):
    # Output-row tile: keep the pipeline deep while keeping the (TH*Wo, Cout)
    # output block (8,128)-legal: TH == Ho (single tile) or TH*Wo % 8 == 0.
    for d in (8, 16, 7, 4, 2, 1):
        if ho % d == 0 and (d == ho or (d * wo) % 8 == 0):
            return d
    return ho


def _conv1x1_bn_relu(x2d, w, b, *, out_dtype):
    m, cin = x2d.shape
    cout = w.shape[1]
    tm = _pick_tm(m)
    return pl.pallas_call(
        _conv1x1_bn_relu_kernel,
        out_shape=jax.ShapeDtypeStruct((m, cout), out_dtype),
        grid=(pl.cdiv(m, tm),),
        in_specs=[
            pl.BlockSpec((tm, cin), lambda i: (i, 0)),
            pl.BlockSpec((cin, cout), lambda i: (0, 0)),
            pl.BlockSpec((1, cout), lambda i: (0, 0)),
        ],
        out_specs=pl.BlockSpec((tm, cout), lambda i: (i, 0)),
        compiler_params=pltpu.CompilerParams(dimension_semantics=("parallel",)),
    )(x2d, w, b)


def _fused_conv2_conv3(x1, xres, prep, *, stride, out_dtype):
    N, H, W, p = x1.shape
    C = xres.shape[-1]
    cout = prep["w3"].shape[1]
    Ho, Wo = H // stride, W // stride
    TH = _pick_th(Ho, Wo)
    T = Ho // TH
    tin = TH * stride                       # center-block input rows per step
    has_down = "wd" in prep

    in_specs = [
        # conv1 output: center rows + clamped 1-row halos (masked in-kernel).
        pl.BlockSpec((1, tin, W, p), lambda n, t: (n, t, 0, 0)),
        pl.BlockSpec((1, 1, W, p),
                     lambda n, t: (n, jnp.maximum(t * tin - 1, 0), 0, 0)),
        pl.BlockSpec((1, 1, W, p),
                     lambda n, t: (n, jnp.minimum((t + 1) * tin, H - 1), 0, 0)),
        # residual source (block input, NHWC): rows feeding this output tile.
        pl.BlockSpec((1, tin, W, C), lambda n, t: (n, t, 0, 0)),
        # folded conv2/conv3 weights + BN shifts (VMEM-resident across steps).
        pl.BlockSpec((3, 3 * p, p), lambda n, t: (0, 0, 0)),
        pl.BlockSpec((1, p), lambda n, t: (0, 0)),
        pl.BlockSpec((p, cout), lambda n, t: (0, 0)),
        pl.BlockSpec((1, cout), lambda n, t: (0, 0)),
    ]
    args = [x1, x1, x1, xres, prep["w2"], prep["b2"], prep["w3"], prep["b3"]]
    if has_down:
        in_specs += [pl.BlockSpec((C, cout), lambda n, t: (0, 0)),
                     pl.BlockSpec((1, cout), lambda n, t: (0, 0))]
        args += [prep["wd"], prep["bd"]]

    kernel = functools.partial(_fused_block_kernel, TH=TH, W=W,
                               stride=stride, has_down=has_down)
    return pl.pallas_call(
        kernel,
        out_shape=jax.ShapeDtypeStruct((N, Ho * Wo, cout), out_dtype),
        grid=(N, T),
        in_specs=in_specs,
        out_specs=pl.BlockSpec((1, TH * Wo, cout), lambda n, t: (n, t, 0)),
        compiler_params=pltpu.CompilerParams(
            dimension_semantics=("parallel", "parallel")),
    )(*args)


# ----------------------------------------------------------------------------
# Parameter prep (one-time, hoisted out of the forward path) + forward
# ----------------------------------------------------------------------------
def _fold_bn(gamma, beta, mean, var, eps):
    scale = gamma * jax.lax.rsqrt(var + eps)
    return scale, beta - mean * scale


def prepare_params(p, *, eps=1e-5, compute_dtype=jnp.float32):
    """Fold eval-mode BN into the conv weights and re-layout for the kernels."""
    planes = p["conv1_w"].shape[0]
    s1, b1 = _fold_bn(*p["bn1"], eps)
    s2, b2 = _fold_bn(*p["bn2"], eps)
    s3, b3 = _fold_bn(*p["bn3"], eps)
    prep = {
        # (Cin, planes)
        "w1": (p["conv1_w"][:, :, 0, 0].T * s1[None, :]).astype(compute_dtype),
        "b1": b1.reshape(1, -1).astype(jnp.float32),
        # (3, 3*planes, planes): dy major, then (dx, cin) merged with dx major.
        "w2": (jnp.transpose(p["conv2_w"], (2, 3, 1, 0))
               .reshape(3, 3 * planes, planes) * s2).astype(compute_dtype),
        "b2": b2.reshape(1, -1).astype(jnp.float32),
        # (planes, 4*planes)
        "w3": (p["conv3_w"][:, :, 0, 0].T * s3[None, :]).astype(compute_dtype),
        "b3": b3.reshape(1, -1).astype(jnp.float32),
    }
    if "down_w" in p:
        sd, bd = _fold_bn(*p["bn_d"], eps)
        prep["wd"] = (p["down_w"][:, :, 0, 0].T * sd[None, :]).astype(compute_dtype)
        prep["bd"] = bd.reshape(1, -1).astype(jnp.float32)
    return prep


def bottleneck(x_nchw, prep, *, stride=1):
    """Bottleneck forward (eval mode). x_nchw: (N, C, H, W). Returns NCHW."""
    N, C, H, W = x_nchw.shape
    cdtype = prep["w1"].dtype
    planes = prep["w1"].shape[1]
    cout = prep["w3"].shape[1]
    has_down = "wd" in prep
    assert has_down or (stride == 1 and C == cout), (
        "identity shortcut requires stride == 1 and inplanes == planes * 4")
    if stride > 1:
        assert H % stride == 0 and W % stride == 0

    # TODO(synk): module's NCHW contract; keep the network NHWC to drop this.
    xh = jnp.transpose(x_nchw, (0, 2, 3, 1)).astype(cdtype)   # (N, H, W, C)

    # conv1 (1x1) + BN + ReLU: row-tiled MXU matmul.
    x1 = _conv1x1_bn_relu(xh.reshape(N * H * W, C), prep["w1"], prep["b1"],
                          out_dtype=cdtype).reshape(N, H, W, planes)

    # conv2 (3x3) + BN + ReLU + conv3 (1x1) + BN + residual + ReLU, fused.
    Ho, Wo = H // stride, W // stride
    out = _fused_conv2_conv3(x1, xh, prep, stride=stride, out_dtype=x_nchw.dtype)
    out = out.reshape(N, Ho, Wo, cout)
    return jnp.transpose(out, (0, 3, 1, 2))


# ----------------------------------------------------------------------------
# Pure-JAX reference
# ----------------------------------------------------------------------------
def _conv2d_ref(x_nhwc, w_oihw, stride, padding):
    return jax.lax.conv_general_dilated(
        x_nhwc, jnp.transpose(w_oihw, (2, 3, 1, 0)),
        window_strides=(stride, stride),
        padding=[(padding, padding), (padding, padding)],
        dimension_numbers=("NHWC", "HWIO", "NHWC"),
        precision=jax.lax.Precision.HIGHEST)


def _bn_ref(y, gamma, beta, mean, var, eps):
    return (y - mean) * jax.lax.rsqrt(var + eps) * gamma + beta


def bottleneck_ref(x_nchw, p, *, stride=1, eps=1e-5):
    x = jnp.transpose(x_nchw, (0, 2, 3, 1))
    out = jnp.maximum(_bn_ref(_conv2d_ref(x, p["conv1_w"], 1, 0), *p["bn1"], eps), 0.0)
    out = jnp.maximum(_bn_ref(_conv2d_ref(out, p["conv2_w"], stride, 1), *p["bn2"], eps), 0.0)
    out = _bn_ref(_conv2d_ref(out, p["conv3_w"], 1, 0), *p["bn3"], eps)
    if "down_w" in p:
        res = _bn_ref(_conv2d_ref(x, p["down_w"], stride, 0), *p["bn_d"], eps)
    else:
        res = x
    out = jnp.maximum(out + res, 0.0)
    return jnp.transpose(out, (0, 3, 1, 2))


# ----------------------------------------------------------------------------
# Test
# ----------------------------------------------------------------------------
if __name__ == "__main__":
    key = jax.random.PRNGKey(0)
    keys = jax.random.split(key, 10)

    N, planes, H, W, expansion = 2, 16, 16, 16, 4
    inplanes = planes * expansion          # 64, so identity shortcut is valid

    x = jax.random.normal(keys[0], (N, inplanes, H, W), jnp.float32)

    def bn_params(k, c):
        k1, k2, k3, k4 = jax.random.split(k, 4)
        gamma = 1.0 + 0.1 * jax.random.normal(k1, (c,), jnp.float32)
        beta = 0.1 * jax.random.normal(k2, (c,), jnp.float32)
        mean = 0.1 * jax.random.normal(k3, (c,), jnp.float32)
        var = jnp.abs(jax.random.normal(k4, (c,), jnp.float32)) + 0.5
        return (gamma, beta, mean, var)

    params = {
        "conv1_w": jax.random.normal(keys[1], (planes, inplanes, 1, 1), jnp.float32) / inplanes ** 0.5,
        "bn1": bn_params(keys[2], planes),
        "conv2_w": jax.random.normal(keys[3], (planes, planes, 3, 3), jnp.float32) / (9 * planes) ** 0.5,
        "bn2": bn_params(keys[4], planes),
        "conv3_w": jax.random.normal(keys[5], (planes * expansion, planes, 1, 1), jnp.float32) / planes ** 0.5,
        "bn3": bn_params(keys[6], planes * expansion),
    }
    params_ds = dict(params)
    params_ds["down_w"] = jax.random.normal(
        keys[7], (planes * expansion, inplanes, 1, 1), jnp.float32) / inplanes ** 0.5
    params_ds["bn_d"] = bn_params(keys[8], planes * expansion)

    # Case 1: stride=1, identity shortcut, f32 compute.
    prep1 = prepare_params(params, compute_dtype=jnp.float32)
    out1 = jax.block_until_ready(bottleneck(x, prep1, stride=1))
    ref1 = bottleneck_ref(x, params, stride=1)
    assert out1.shape == ref1.shape
    err1 = jnp.max(jnp.abs(out1 - ref1))
    assert jnp.allclose(out1, ref1, atol=5e-3, rtol=5e-3), f"stride=1 f32 mismatch: {err1}"

    # Case 2: stride=2, projection downsample, f32 compute.
    prep2 = prepare_params(params_ds, compute_dtype=jnp.float32)
    out2 = jax.block_until_ready(bottleneck(x, prep2, stride=2))
    ref2 = bottleneck_ref(x, params_ds, stride=2)
    assert out2.shape == ref2.shape
    err2 = jnp.max(jnp.abs(out2 - ref2))
    assert jnp.allclose(out2, ref2, atol=5e-3, rtol=5e-3), f"stride=2 f32 mismatch: {err2}"

    # Case 3: stride=2, projection downsample, bf16 weights/activations
    # (f32 accumulation + epilogue) -- the bandwidth-saving production path.
    prep3 = prepare_params(params_ds, compute_dtype=jnp.bfloat16)
    out3 = jax.block_until_ready(bottleneck(x, prep3, stride=2))
    assert out3.shape == ref2.shape
    err3 = jnp.max(jnp.abs(out3.astype(jnp.float32) - ref2))
    assert jnp.allclose(out3.astype(jnp.float32), ref2, atol=2e-1, rtol=1e-1), \
        f"stride=2 bf16 mismatch: {err3}"

    print("KERNEL_OK")
</pallas_src>

<mosaic_0001>
module attributes {stable_mosaic.version = 11 : i64} {
  func.func @_conv1x1_bn_relu_kernel(%arg0: i32, %arg1: memref<512x64xf32, #tpu.memory_space<vmem>>, %arg2: memref<64x16xf32, #tpu.memory_space<vmem>>, %arg3: memref<1x16xf32, #tpu.memory_space<vmem>>, %arg4: memref<512x16xf32, #tpu.memory_space<vmem>>) attributes {dimension_semantics = [#tpu.dimension_semantics<parallel>], iteration_bounds = array<i64: 1>, scalar_prefetch = 0 : i64, scratch_operands = 0 : i64, tpu.core_type = #tpu.core_type<tc>, window_params = [{transform_indices = @transform_0, window_bounds = array<i64: 512, 64>}, {pipeline_mode = #tpu.pipeline_mode<synchronous>, transform_indices = @transform_1, window_bounds = array<i64: 64, 16>}, {pipeline_mode = #tpu.pipeline_mode<synchronous>, transform_indices = @transform_2, window_bounds = array<i64: 1, 16>}, {transform_indices = @transform_3, window_bounds = array<i64: 512, 16>}]} {
    %c0 = arith.constant 0 : index
    %c0_0 = arith.constant 0 : index
    %0 = vector.load %arg1[%c0, %c0_0] : memref<512x64xf32, #tpu.memory_space<vmem>>, vector<512x64xf32>
    %c0_1 = arith.constant 0 : index
    %c0_2 = arith.constant 0 : index
    %1 = vector.load %arg2[%c0_1, %c0_2] : memref<64x16xf32, #tpu.memory_space<vmem>>, vector<64x16xf32>
    %cst = arith.constant dense<0.000000e+00> : vector<512x16xf32>
    %2 = tpu.matmul %0, %1, %cst {dimension_numbers = #tpu.dot_dimension_numbers<[1], [0], [0], [1], [0, 0, 1, 1], [], []>} : vector<512x64xf32>, vector<64x16xf32>, vector<512x16xf32> -> vector<512x16xf32>
    %c0_3 = arith.constant 0 : index
    %c0_4 = arith.constant 0 : index
    %3 = vector.load %arg3[%c0_3, %c0_4] : memref<1x16xf32, #tpu.memory_space<vmem>>, vector<1x16xf32>
    %4 = vector.broadcast %3 : vector<1x16xf32> to vector<512x16xf32>
    %5 = arith.addf %2, %4 : vector<512x16xf32>
    %cst_5 = arith.constant 0.000000e+00 : f32
    %6 = vector.broadcast %cst_5 : f32 to vector<512x16xf32>
    %7 = arith.maximumf %5, %6 : vector<512x16xf32>
    %c0_6 = arith.constant 0 : index
    %c0_7 = arith.constant 0 : index
    %8 = vector.load %arg4[%c0_6, %c0_7] : memref<512x16xf32, #tpu.memory_space<vmem>>, vector<512x16xf32>
    tpu.vector_store %arg4[%c0_6, %c0_7], %7 {strides = array<i32>} : memref<512x16xf32, #tpu.memory_space<vmem>>, vector<512x16xf32>,
    return
  }
  func.func @transform_0(%arg0: i32) -> (i32, i32) {
    %c0_i32 = arith.constant 0 : i32
    %c0_i32_0 = arith.constant 0 : i32
    return %arg0, %c0_i32 : i32, i32
  }
  func.func @transform_1(%arg0: i32) -> (i32, i32) {
    %c0_i32 = arith.constant 0 : i32
    %c0_i32_0 = arith.constant 0 : i32
    %c0_i32_1 = arith.constant 0 : i32
    return %c0_i32, %c0_i32_0 : i32, i32
  }
  func.func @transform_2(%arg0: i32) -> (i32, i32) {
    %c0_i32 = arith.constant 0 : i32
    %c0_i32_0 = arith.constant 0 : i32
    %c0_i32_1 = arith.constant 0 : i32
    return %c0_i32, %c0_i32_0 : i32, i32
  }
  func.func @transform_3(%arg0: i32) -> (i32, i32) {
    %c0_i32 = arith.constant 0 : i32
    %c0_i32_0 = arith.constant 0 : i32
    return %arg0, %c0_i32 : i32, i32
  }
}

</mosaic_0001>

<llo_original>
// kernel: tpu_custom_call.1
$region0: #{tpu_custom_call.1}
  #allocation0 [shape = 'u32[]', space=smem, size = 0x4, offset = 0x4, fixed_abs, tag = 'smem constant byte address 0x4 - core index']
  #allocation1 [shape = 'u32[72,128]{1,0:T(1,128)}', space=vmem, size = 0x9000, scoped, tag = 'internal scratch']
  %s0 = inlined_call_operand.vmem [shape: f32[512,64], index: 0, kind: input, shape index: {}]
  %s1 = inlined_call_operand.vmem [shape: f32[64,16], index: 1, kind: input, shape index: {}]
  %s2 = inlined_call_operand.vmem [shape: f32[1,16], index: 2, kind: input, shape index: {}]
  %s3 = inlined_call_operand.vmem [shape: f32[512,16], index: 3, kind: output, shape index: {}]
  %s4 = sld [smem:[#allocation0]]
  $region22: #{tpu_custom_call.1} parent=0
    _
  %s6 = ssub.s32 1, %s4
  %s7 = scalar_select 0, %s6, %s4
  // Predicated region
  $region2: #{tpu_custom_call.1} parent=0 // pred_check
    _
  $region3: #{tpu_custom_call.1} parent=0 // pred_check_branch
    %9 = sbr.rel (0) target = $region5
  $region4: #{tpu_custom_call.1} parent=0 // pred_region
    _
  $region5: #{tpu_custom_call.1} parent=0 // pred_fallthru
    _
  // Predicated region
  $region6: #{tpu_custom_call.1} parent=0 // pred_check
    _
  $region7: #{tpu_custom_call.1} parent=0 // pred_check_branch
    %11 = sbr.rel (0) target = $region9
  $region8: #{tpu_custom_call.1} parent=0 // pred_region
    _
  $region9: #{tpu_custom_call.1} parent=0 // pred_fallthru
    _
  // Predicated region
  $region10: #{tpu_custom_call.1} parent=0 // pred_check
    _
  $region11: #{tpu_custom_call.1} parent=0 // pred_check_branch
    %13 = sbr.rel (0) target = $region13
  $region12: #{tpu_custom_call.1} parent=0 // pred_region
    _
  $region13: #{tpu_custom_call.1} parent=0 // pred_fallthru
    _
  %v14 = vld [vmem:[%s0] sm:$0xff]
  %v15 = vld [vmem:[%s0 + $0x8] sm:$0xff]
  %v16 = vld [vmem:[%s0 + $0x10] sm:$0xff]
  %v17 = vld [vmem:[%s0 + $0x18] sm:$0xff]
  %v18 = vld [vmem:[%s0 + $0x20] sm:$0xff]
  %v19 = vld [vmem:[%s0 + $0x28] sm:$0xff]
  %v20 = vld [vmem:[%s0 + $0x30] sm:$0xff]
  %v21 = vld [vmem:[%s0 + $0x38] sm:$0xff]
  %v22 = vld [vmem:[%s0 + $0x40] sm:$0xff]
  %v23 = vld [vmem:[%s0 + $0x48] sm:$0xff]
  %v24 = vld [vmem:[%s0 + $0x50] sm:$0xff]
  %v25 = vld [vmem:[%s0 + $0x58] sm:$0xff]
  %v26 = vld [vmem:[%s0 + $0x60] sm:$0xff]
  %v27 = vld [vmem:[%s0 + $0x68] sm:$0xff]
  %v28 = vld [vmem:[%s0 + $0x70] sm:$0xff]
  %v29 = vld [vmem:[%s0 + $0x78] sm:$0xff]
  %v30 = vld [vmem:[%s0 + $0x80] sm:$0xff]
  %v31 = vld [vmem:[%s0 + $0x88] sm:$0xff]
  %v32 = vld [vmem:[%s0 + $0x90] sm:$0xff]
  %v33 = vld [vmem:[%s0 + $0x98] sm:$0xff]
  %v34 = vld [vmem:[%s0 + $0xa0] sm:$0xff]
  %v35 = vld [vmem:[%s0 + $0xa8] sm:$0xff]
  %v36 = vld [vmem:[%s0 + $0xb0] sm:$0xff]
  %v37 = vld [vmem:[%s0 + $0xb8] sm:$0xff]
  %v38 = vld [vmem:[%s0 + $0xc0] sm:$0xff]
  %v39 = vld [vmem:[%s0 + $0xc8] sm:$0xff]
  %v40 = vld [vmem:[%s0 + $0xd0] sm:$0xff]
  %v41 = vld [vmem:[%s0 + $0xd8] sm:$0xff]
  %v42 = vld [vmem:[%s0 + $0xe0] sm:$0xff]
  %v43 = vld [vmem:[%s0 + $0xe8] sm:$0xff]
  %v44 = vld [vmem:[%s0 + $0xf0] sm:$0xff]
  %v45 = vld [vmem:[%s0 + $0xf8] sm:$0xff]
  %v46 = vld [vmem:[%s0 + $0x100] sm:$0xff]
  %v47 = vld [vmem:[%s0 + $0x108] sm:$0xff]
  %v48 = vld [vmem:[%s0 + $0x110] sm:$0xff]
  %v49 = vld [vmem:[%s0 + $0x118] sm:$0xff]
  %v50 = vld [vmem:[%s0 + $0x120] sm:$0xff]
  %v51 = vld [vmem:[%s0 + $0x128] sm:$0xff]
  %v52 = vld [vmem:[%s0 + $0x130] sm:$0xff]
  %v53 = vld [vmem:[%s0 + $0x138] sm:$0xff]
  %v54 = vld [vmem:[%s0 + $0x140] sm:$0xff]
  %v55 = vld [vmem:[%s0 + $0x148] sm:$0xff]
  %v56 = vld [vmem:[%s0 + $0x150] sm:$0xff]
  %v57 = vld [vmem:[%s0 + $0x158] sm:$0xff]
  %v58 = vld [vmem:[%s0 + $0x160] sm:$0xff]
  %v59 = vld [vmem:[%s0 + $0x168] sm:$0xff]
  %v60 = vld [vmem:[%s0 + $0x170] sm:$0xff]
  %v61 = vld [vmem:[%s0 + $0x178] sm:$0xff]
  %v62 = vld [vmem:[%s0 + $0x180] sm:$0xff]
  %v63 = vld [vmem:[%s0 + $0x188] sm:$0xff]
  %v64 = vld [vmem:[%s0 + $0x190] sm:$0xff]
  %v65 = vld [vmem:[%s0 + $0x198] sm:$0xff]
  %v66 = vld [vmem:[%s0 + $0x1a0] sm:$0xff]
  %v67 = vld [vmem:[%s0 + $0x1a8] sm:$0xff]
  %v68 = vld [vmem:[%s0 + $0x1b0] sm:$0xff]
  %v69 = vld [vmem:[%s0 + $0x1b8] sm:$0xff]
  %v70 = vld [vmem:[%s0 + $0x1c0] sm:$0xff]
  %v71 = vld [vmem:[%s0 + $0x1c8] sm:$0xff]
  %v72 = vld [vmem:[%s0 + $0x1d0] sm:$0xff]
  %v73 = vld [vmem:[%s0 + $0x1d8] sm:$0xff]
  %v74 = vld [vmem:[%s0 + $0x1e0] sm:$0xff]
  %v75 = vld [vmem:[%s0 + $0x1e8] sm:$0xff]
  %v76 = vld [vmem:[%s0 + $0x1f0] sm:$0xff]
  %v77 = vld [vmem:[%s0 + $0x1f8] sm:$0xff]
  %v78 = vld [vmem:[%s1] sm:$0xff]
  %v79 = vld [vmem:[%s1 + $0x8] sm:$0xff]
  %v80 = vld [vmem:[%s1 + $0x10] sm:$0xff]
  %v81 = vld [vmem:[%s1 + $0x18] sm:$0xff]
  %v82 = vld [vmem:[%s1 + $0x20] sm:$0xff]
  %v83 = vld [vmem:[%s1 + $0x28] sm:$0xff]
  %v84 = vld [vmem:[%s1 + $0x30] sm:$0xff]
  %v85 = vld [vmem:[%s1 + $0x38] sm:$0xff]
  %v86 = vld [vmem:[%s2] sm:$0x1]
  %v88 = vperm.slane %v86, 0
  %vm90 = vcmask 523264
  %v92 = vsel %vm90, %v14, 0
  %v95 = vsel %vm90, %v15, 0
  %v98 = vsel %vm90, %v16, 0
  %v101 = vsel %vm90, %v17, 0
  %v104 = vsel %vm90, %v18, 0
  %v107 = vsel %vm90, %v19, 0
  %v110 = vsel %vm90, %v20, 0
  %v113 = vsel %vm90, %v21, 0
  %v116 = vsel %vm90, %v22, 0
  %v119 = vsel %vm90, %v23, 0
  %v122 = vsel %vm90, %v24, 0
  %v125 = vsel %vm90, %v25, 0
  %v128 = vsel %vm90, %v26, 0
  %v131 = vsel %vm90, %v27, 0
  %v134 = vsel %vm90, %v28, 0
  %v137 = vsel %vm90, %v29, 0
  %v140 = vsel %vm90, %v30, 0
  %v143 = vsel %vm90, %v31, 0
  %v146 = vsel %vm90, %v32, 0
  %v149 = vsel %vm90, %v33, 0
  %v152 = vsel %vm90, %v34, 0
  %v155 = vsel %vm90, %v35, 0
  %v158 = vsel %vm90, %v36, 0
  %v161 = vsel %vm90, %v37, 0
  %v164 = vsel %vm90, %v38, 0
  %v167 = vsel %vm90, %v39, 0
  %v170 = vsel %vm90, %v40, 0
  %v173 = vsel %vm90, %v41, 0
  %v176 = vsel %vm90, %v42, 0
  %v179 = vsel %vm90, %v43, 0
  %v182 = vsel %vm90, %v44, 0
  %v185 = vsel %vm90, %v45, 0
  %v188 = vsel %vm90, %v46, 0
  %v191 = vsel %vm90, %v47, 0
  %v194 = vsel %vm90, %v48, 0
  %v197 = vsel %vm90, %v49, 0
  %v200 = vsel %vm90, %v50, 0
  %v203 = vsel %vm90, %v51, 0
  %v206 = vsel %vm90, %v52, 0
  %v209 = vsel %vm90, %v53, 0
  %v212 = vsel %vm90, %v54, 0
  %v215 = vsel %vm90, %v55, 0
  %v218 = vsel %vm90, %v56, 0
  %v221 = vsel %vm90, %v57, 0
  %v224 = vsel %vm90, %v58, 0
  %v227 = vsel %vm90, %v59, 0
  %v230 = vsel %vm90, %v60, 0
  %v233 = vsel %vm90, %v61, 0
  %v236 = vsel %vm90, %v62, 0
  %v239 = vsel %vm90, %v63, 0
  %v242 = vsel %vm90, %v64, 0
  %v245 = vsel %vm90, %v65, 0
  %v248 = vsel %vm90, %v66, 0
  %v251 = vsel %vm90, %v67, 0
  %v254 = vsel %vm90, %v68, 0
  %v257 = vsel %vm90, %v69, 0
  %v260 = vsel %vm90, %v70, 0
  %v263 = vsel %vm90, %v71, 0
  %v266 = vsel %vm90, %v72, 0
  %v269 = vsel %vm90, %v73, 0
  %v272 = vsel %vm90, %v74, 0
  %v275 = vsel %vm90, %v75, 0
  %v278 = vsel %vm90, %v76, 0
  %v281 = vsel %vm90, %v77, 0
  %283 = vmatpush.msra.mxu0 0.0
  %284 = vmatpush.msra.mxu0 0.0
  %285 = vmatpush.msra.mxu0 0.0
  %286 = vmatpush.msra.mxu0 0.0
  %287 = vmatpush.msra.mxu0 0.0
  %288 = vmatpush.msra.mxu0 0.0
  %289 = vmatpush.msra.mxu0 0.0
  %290 = vmatpush.msra.mxu0 0.0
  %291 = vmatpush.msra.mxu0 %v85
  %292 = vmatpush.msra.mxu0 %v84
  %293 = vmatpush.msra.mxu0 %v83
  %294 = vmatpush.msra.mxu0 %v82
  %295 = vmatpush.msra.mxu0 %v81
  %296 = vmatpush.msra.mxu0 %v80
  %297 = vmatpush.msra.mxu0 %v79
  %298 = vmatpush.msra.mxu0 %v78
  %299 = vmatmul.f32.gmra.mxu0 %v92
  %v300 = vpop.f32.mrf.mxu0
  %v301 = vadd.f32 %v88, %v300
  %302 = vmatmul.f32.gmra.mxu0 %v95
  %v303 = vpop.f32.mrf.mxu0
  %v304 = vadd.f32 %v88, %v303
  %305 = vmatmul.f32.gmra.mxu0 %v98
  %v306 = vpop.f32.mrf.mxu0
  %v307 = vadd.f32 %v88, %v306
  %308 = vmatmul.f32.gmra.mxu0 %v101
  %v309 = vpop.f32.mrf.mxu0
  %v310 = vadd.f32 %v88, %v309
  %311 = vmatmul.f32.gmra.mxu0 %v104
  %v312 = vpop.f32.mrf.mxu0
  %v313 = vadd.f32 %v88, %v312
  %314 = vmatmul.f32.gmra.mxu0 %v107
  %v315 = vpop.f32.mrf.mxu0
  %v316 = vadd.f32 %v88, %v315
  %317 = vmatmul.f32.gmra.mxu0 %v110
  %v318 = vpop.f32.mrf.mxu0
  %v319 = vadd.f32 %v88, %v318
  %320 = vmatmul.f32.gmra.mxu0 %v113
  %v321 = vpop.f32.mrf.mxu0
  %v322 = vadd.f32 %v88, %v321
  %323 = vmatmul.f32.gmra.mxu0 %v116
  %v324 = vpop.f32.mrf.mxu0
  %v325 = vadd.f32 %v88, %v324
  %326 = vmatmul.f32.gmra.mxu0 %v119
  %v327 = vpop.f32.mrf.mxu0
  %v328 = vadd.f32 %v88, %v327
  %329 = vmatmul.f32.gmra.mxu0 %v122
  %v330 = vpop.f32.mrf.mxu0
  %v331 = vadd.f32 %v88, %v330
  %332 = vmatmul.f32.gmra.mxu0 %v125
  %v333 = vpop.f32.mrf.mxu0
  %v334 = vadd.f32 %v88, %v333
  %335 = vmatmul.f32.gmra.mxu0 %v128
  %v336 = vpop.f32.mrf.mxu0
  %v337 = vadd.f32 %v88, %v336
  %338 = vmatmul.f32.gmra.mxu0 %v131
  %v339 = vpop.f32.mrf.mxu0
  %v340 = vadd.f32 %v88, %v339
  %341 = vmatmul.f32.gmra.mxu0 %v134
  %v342 = vpop.f32.mrf.mxu0
  %v343 = vadd.f32 %v88, %v342
  %344 = vmatmul.f32.gmra.mxu0 %v137
  %v345 = vpop.f32.mrf.mxu0
  %v346 = vadd.f32 %v88, %v345
  %347 = vmatmul.f32.gmra.mxu0 %v140
  %v348 = vpop.f32.mrf.mxu0
  %v349 = vadd.f32 %v88, %v348
  %350 = vmatmul.f32.gmra.mxu0 %v143
  %v351 = vpop.f32.mrf.mxu0
  %v352 = vadd.f32 %v88, %v351
  %353 = vmatmul.f32.gmra.mxu0 %v146
  %v354 = vpop.f32.mrf.mxu0
  %v355 = vadd.f32 %v88, %v354
  %356 = vmatmul.f32.gmra.mxu0 %v149
  %v357 = vpop.f32.mrf.mxu0
  %v358 = vadd.f32 %v88, %v357
  %359 = vmatmul.f32.gmra.mxu0 %v152
  %v360 = vpop.f32.mrf.mxu0
  %v361 = vadd.f32 %v88, %v360
  %362 = vmatmul.f32.gmra.mxu0 %v155
  %v363 = vpop.f32.mrf.mxu0
  %v364 = vadd.f32 %v88, %v363
  %365 = vmatmul.f32.gmra.mxu0 %v158
  %v366 = vpop.f32.mrf.mxu0
  %v367 = vadd.f32 %v88, %v366
  %368 = vmatmul.f32.gmra.mxu0 %v161
  %v369 = vpop.f32.mrf.mxu0
  %v370 = vadd.f32 %v88, %v369
  %371 = vmatmul.f32.gmra.mxu0 %v164
  %v372 = vpop.f32.mrf.mxu0
  %v373 = vadd.f32 %v88, %v372
  %374 = vmatmul.f32.gmra.mxu0 %v167
  %v375 = vpop.f32.mrf.mxu0
  %v376 = vadd.f32 %v88, %v375
  %377 = vmatmul.f32.gmra.mxu0 %v170
  %v378 = vpop.f32.mrf.mxu0
  %v379 = vadd.f32 %v88, %v378
  %380 = vmatmul.f32.gmra.mxu0 %v173
  %v381 = vpop.f32.mrf.mxu0
  %v382 = vadd.f32 %v88, %v381
  %383 = vmatmul.f32.gmra.mxu0 %v176
  %v384 = vpop.f32.mrf.mxu0
  %v385 = vadd.f32 %v88, %v384
  %386 = vmatmul.f32.gmra.mxu0 %v179
  %v387 = vpop.f32.mrf.mxu0
  %v388 = vadd.f32 %v88, %v387
  %389 = vmatmul.f32.gmra.mxu0 %v182
  %v390 = vpop.f32.mrf.mxu0
  %v391 = vadd.f32 %v88, %v390
  %392 = vmatmul.f32.gmra.mxu0 %v185
  %v393 = vpop.f32.mrf.mxu0
  %v394 = vadd.f32 %v88, %v393
  %395 = vmatmul.f32.gmra.mxu0 %v188
  %v396 = vpop.f32.mrf.mxu0
  %v397 = vadd.f32 %v88, %v396
  %398 = vmatmul.f32.gmra.mxu0 %v191
  %v399 = vpop.f32.mrf.mxu0
  %v400 = vadd.f32 %v88, %v399
  %401 = vmatmul.f32.gmra.mxu0 %v194
  %v402 = vpop.f32.mrf.mxu0
  %v403 = vadd.f32 %v88, %v402
  %404 = vmatmul.f32.gmra.mxu0 %v197
  %v405 = vpop.f32.mrf.mxu0
  %v406 = vadd.f32 %v88, %v405
  %407 = vmatmul.f32.gmra.mxu0 %v200
  %v408 = vpop.f32.mrf.mxu0
  %v409 = vadd.f32 %v88, %v408
  %410 = vmatmul.f32.gmra.mxu0 %v203
  %v411 = vpop.f32.mrf.mxu0
  %v412 = vadd.f32 %v88, %v411
  %413 = vmatmul.f32.gmra.mxu0 %v206
  %v414 = vpop.f32.mrf.mxu0
  %v415 = vadd.f32 %v88, %v414
  %416 = vmatmul.f32.gmra.mxu0 %v209
  %v417 = vpop.f32.mrf.mxu0
  %v418 = vadd.f32 %v88, %v417
  %419 = vmatmul.f32.gmra.mxu0 %v212
  %v420 = vpop.f32.mrf.mxu0
  %v421 = vadd.f32 %v88, %v420
  %422 = vmatmul.f32.gmra.mxu0 %v215
  %v423 = vpop.f32.mrf.mxu0
  %v424 = vadd.f32 %v88, %v423
  %425 = vmatmul.f32.gmra.mxu0 %v218
  %v426 = vpop.f32.mrf.mxu0
  %v427 = vadd.f32 %v88, %v426
  %428 = vmatmul.f32.gmra.mxu0 %v221
  %v429 = vpop.f32.mrf.mxu0
  %v430 = vadd.f32 %v88, %v429
  %431 = vmatmul.f32.gmra.mxu0 %v224
  %v432 = vpop.f32.mrf.mxu0
  %v433 = vadd.f32 %v88, %v432
  %434 = vmatmul.f32.gmra.mxu0 %v227
  %v435 = vpop.f32.mrf.mxu0
  %v436 = vadd.f32 %v88, %v435
  %437 = vmatmul.f32.gmra.mxu0 %v230
  %v438 = vpop.f32.mrf.mxu0
  %v439 = vadd.f32 %v88, %v438
  %440 = vmatmul.f32.gmra.mxu0 %v233
  %v441 = vpop.f32.mrf.mxu0
  %v442 = vadd.f32 %v88, %v441
  %443 = vmatmul.f32.gmra.mxu0 %v236
  %v444 = vpop.f32.mrf.mxu0
  %v445 = vadd.f32 %v88, %v444
  %446 = vmatmul.f32.gmra.mxu0 %v239
  %v447 = vpop.f32.mrf.mxu0
  %v448 = vadd.f32 %v88, %v447
  %449 = vmatmul.f32.gmra.mxu0 %v242
  %v450 = vpop.f32.mrf.mxu0
  %v451 = vadd.f32 %v88, %v450
  %452 = vmatmul.f32.gmra.mxu0 %v245
  %v453 = vpop.f32.mrf.mxu0
  %v454 = vadd.f32 %v88, %v453
  %455 = vmatmul.f32.gmra.mxu0 %v248
  %v456 = vpop.f32.mrf.mxu0
  %v457 = vadd.f32 %v88, %v456
  %458 = vmatmul.f32.gmra.mxu0 %v251
  %v459 = vpop.f32.mrf.mxu0
  %v460 = vadd.f32 %v88, %v459
  %461 = vmatmul.f32.gmra.mxu0 %v254
  %v462 = vpop.f32.mrf.mxu0
  %v463 = vadd.f32 %v88, %v462
  %464 = vmatmul.f32.gmra.mxu0 %v257
  %v465 = vpop.f32.mrf.mxu0
  %v466 = vadd.f32 %v88, %v465
  %467 = vmatmul.f32.gmra.mxu0 %v260
  %v468 = vpop.f32.mrf.mxu0
  %v469 = vadd.f32 %v88, %v468
  %470 = vmatmul.f32.gmra.mxu0 %v263
  %v471 = vpop.f32.mrf.mxu0
  %v472 = vadd.f32 %v88, %v471
  %473 = vmatmul.f32.gmra.mxu0 %v266
  %v474 = vpop.f32.mrf.mxu0
  %v475 = vadd.f32 %v88, %v474
  %476 = vmatmul.f32.gmra.mxu0 %v269
  %v477 = vpop.f32.mrf.mxu0
  %v478 = vadd.f32 %v88, %v477
  %479 = vmatmul.f32.gmra.mxu0 %v272
  %v480 = vpop.f32.mrf.mxu0
  %v481 = vadd.f32 %v88, %v480
  %482 = vmatmul.f32.gmra.mxu0 %v275
  %v483 = vpop.f32.mrf.mxu0
  %v484 = vadd.f32 %v88, %v483
  %485 = vmatmul.f32.gmra.mxu0 %v278
  %v486 = vpop.f32.mrf.mxu0
  %v487 = vadd.f32 %v88, %v486
  %488 = vmatmul.f32.gmra.mxu0 %v281
  %v489 = vpop.f32.mrf.mxu0
  %v490 = vadd.f32 %v88, %v489
  %491 = vdwg.mxu0
  %v492 = vmax.f32 %v301, 0.0
  %v493 = vmax.f32 %v304, 0.0
  %v494 = vmax.f32 %v307, 0.0
  %v495 = vmax.f32 %v310, 0.0
  %v496 = vmax.f32 %v313, 0.0
  %v497 = vmax.f32 %v316, 0.0
  %v498 = vmax.f32 %v319, 0.0
  %v499 = vmax.f32 %v322, 0.0
  %v500 = vmax.f32 %v325, 0.0
  %v501 = vmax.f32 %v328, 0.0
  %v502 = vmax.f32 %v331, 0.0
  %v503 = vmax.f32 %v334, 0.0
  %v504 = vmax.f32 %v337, 0.0
  %v505 = vmax.f32 %v340, 0.0
  %v506 = vmax.f32 %v343, 0.0
  %v507 = vmax.f32 %v346, 0.0
  %v508 = vmax.f32 %v349, 0.0
  %v509 = vmax.f32 %v352, 0.0
  %v510 = vmax.f32 %v355, 0.0
  %v511 = vmax.f32 %v358, 0.0
  %v512 = vmax.f32 %v361, 0.0
  %v513 = vmax.f32 %v364, 0.0
  %v514 = vmax.f32 %v367, 0.0
  %v515 = vmax.f32 %v370, 0.0
  %v516 = vmax.f32 %v373, 0.0
  %v517 = vmax.f32 %v376, 0.0
  %v518 = vmax.f32 %v379, 0.0
  %v519 = vmax.f32 %v382, 0.0
  %v520 = vmax.f32 %v385, 0.0
  %v521 = vmax.f32 %v388, 0.0
  %v522 = vmax.f32 %v391, 0.0
  %v523 = vmax.f32 %v394, 0.0
  %v524 = vmax.f32 %v397, 0.0
  %v525 = vmax.f32 %v400, 0.0
  %v526 = vmax.f32 %v403, 0.0
  %v527 = vmax.f32 %v406, 0.0
  %v528 = vmax.f32 %v409, 0.0
  %v529 = vmax.f32 %v412, 0.0
  %v530 = vmax.f32 %v415, 0.0
  %v531 = vmax.f32 %v418, 0.0
  %v532 = vmax.f32 %v421, 0.0
  %v533 = vmax.f32 %v424, 0.0
  %v534 = vmax.f32 %v427, 0.0
  %v535 = vmax.f32 %v430, 0.0
  %v536 = vmax.f32 %v433, 0.0
  %v537 = vmax.f32 %v436, 0.0
  %v538 = vmax.f32 %v439, 0.0
  %v539 = vmax.f32 %v442, 0.0
  %v540 = vmax.f32 %v445, 0.0
  %v541 = vmax.f32 %v448, 0.0
  %v542 = vmax.f32 %v451, 0.0
  %v543 = vmax.f32 %v454, 0.0
  %v544 = vmax.f32 %v457, 0.0
  %v545 = vmax.f32 %v460, 0.0
  %v546 = vmax.f32 %v463, 0.0
  %v547 = vmax.f32 %v466, 0.0
  %v548 = vmax.f32 %v469, 0.0
  %v549 = vmax.f32 %v472, 0.0
  %v550 = vmax.f32 %v475, 0.0
  %v551 = vmax.f32 %v478, 0.0
  %v552 = vmax.f32 %v481, 0.0
  %v553 = vmax.f32 %v484, 0.0
  %v554 = vmax.f32 %v487, 0.0
  %v555 = vmax.f32 %v490, 0.0
  %vm556 = vcmask 130048
  %557 = vst.msk [vmem:[%s3] sm:$0xff] %vm556, %v492
  %558 = vst.msk [vmem:[%s3 + $0x8] sm:$0xff] %vm556, %v493
  %559 = vst.msk [vmem:[%s3 + $0x10] sm:$0xff] %vm556, %v494
  %560 = vst.msk [vmem:[%s3 + $0x18] sm:$0xff] %vm556, %v495
  %561 = vst.msk [vmem:[%s3 + $0x20] sm:$0xff] %vm556, %v496
  %562 = vst.msk [vmem:[%s3 + $0x28] sm:$0xff] %vm556, %v497
  %563 = vst.msk [vmem:[%s3 + $0x30] sm:$0xff] %vm556, %v498
  %564 = vst.msk [vmem:[%s3 + $0x38] sm:$0xff] %vm556, %v499
  %565 = vst.msk [vmem:[%s3 + $0x40] sm:$0xff] %vm556, %v500
  %566 = vst.msk [vmem:[%s3 + $0x48] sm:$0xff] %vm556, %v501
  %567 = vst.msk [vmem:[%s3 + $0x50] sm:$0xff] %vm556, %v502
  %568 = vst.msk [vmem:[%s3 + $0x58] sm:$0xff] %vm556, %v503
  %569 = vst.msk [vmem:[%s3 + $0x60] sm:$0xff] %vm556, %v504
  %570 = vst.msk [vmem:[%s3 + $0x68] sm:$0xff] %vm556, %v505
  %571 = vst.msk [vmem:[%s3 + $0x70] sm:$0xff] %vm556, %v506
  %572 = vst.msk [vmem:[%s3 + $0x78] sm:$0xff] %vm556, %v507
  %573 = vst.msk [vmem:[%s3 + $0x80] sm:$0xff] %vm556, %v508
  %574 = vst.msk [vmem:[%s3 + $0x88] sm:$0xff] %vm556, %v509
  %575 = vst.msk [vmem:[%s3 + $0x90] sm:$0xff] %vm556, %v510
  %576 = vst.msk [vmem:[%s3 + $0x98] sm:$0xff] %vm556, %v511
  %577 = vst.msk [vmem:[%s3 + $0xa0] sm:$0xff] %vm556, %v512
  %578 = vst.msk [vmem:[%s3 + $0xa8] sm:$0xff] %vm556, %v513
  %579 = vst.msk [vmem:[%s3 + $0xb0] sm:$0xff] %vm556, %v514
  %580 = vst.msk [vmem:[%s3 + $0xb8] sm:$0xff] %vm556, %v515
  %581 = vst.msk [vmem:[%s3 + $0xc0] sm:$0xff] %vm556, %v516
  %582 = vst.msk [vmem:[%s3 + $0xc8] sm:$0xff] %vm556, %v517
  %583 = vst.msk [vmem:[%s3 + $0xd0] sm:$0xff] %vm556, %v518
  %584 = vst.msk [vmem:[%s3 + $0xd8] sm:$0xff] %vm556, %v519
  %585 = vst.msk [vmem:[%s3 + $0xe0] sm:$0xff] %vm556, %v520
  %586 = vst.msk [vmem:[%s3 + $0xe8] sm:$0xff] %vm556, %v521
  %587 = vst.msk [vmem:[%s3 + $0xf0] sm:$0xff] %vm556, %v522
  %588 = vst.msk [vmem:[%s3 + $0xf8] sm:$0xff] %vm556, %v523
  %589 = vst.msk [vmem:[%s3 + $0x100] sm:$0xff] %vm556, %v524
  %590 = vst.msk [vmem:[%s3 + $0x108] sm:$0xff] %vm556, %v525
  %591 = vst.msk [vmem:[%s3 + $0x110] sm:$0xff] %vm556, %v526
  %592 = vst.msk [vmem:[%s3 + $0x118] sm:$0xff] %vm556, %v527
  %593 = vst.msk [vmem:[%s3 + $0x120] sm:$0xff] %vm556, %v528
  %594 = vst.msk [vmem:[%s3 + $0x128] sm:$0xff] %vm556, %v529
  %595 = vst.msk [vmem:[%s3 + $0x130] sm:$0xff] %vm556, %v530
  %596 = vst.msk [vmem:[%s3 + $0x138] sm:$0xff] %vm556, %v531
  %597 = vst.msk [vmem:[%s3 + $0x140] sm:$0xff] %vm556, %v532
  %598 = vst.msk [vmem:[%s3 + $0x148] sm:$0xff] %vm556, %v533
  %599 = vst.msk [vmem:[%s3 + $0x150] sm:$0xff] %vm556, %v534
  %600 = vst.msk [vmem:[%s3 + $0x158] sm:$0xff] %vm556, %v535
  %601 = vst.msk [vmem:[%s3 + $0x160] sm:$0xff] %vm556, %v536
  %602 = vst.msk [vmem:[%s3 + $0x168] sm:$0xff] %vm556, %v537
  %603 = vst.msk [vmem:[%s3 + $0x170] sm:$0xff] %vm556, %v538
  %604 = vst.msk [vmem:[%s3 + $0x178] sm:$0xff] %vm556, %v539
  %605 = vst.msk [vmem:[%s3 + $0x180] sm:$0xff] %vm556, %v540
  %606 = vst.msk [vmem:[%s3 + $0x188] sm:$0xff] %vm556, %v541
  %607 = vst.msk [vmem:[%s3 + $0x190] sm:$0xff] %vm556, %v542
  %608 = vst.msk [vmem:[%s3 + $0x198] sm:$0xff] %vm556, %v543
  %609 = vst.msk [vmem:[%s3 + $0x1a0] sm:$0xff] %vm556, %v544
  %610 = vst.msk [vmem:[%s3 + $0x1a8] sm:$0xff] %vm556, %v545
  %611 = vst.msk [vmem:[%s3 + $0x1b0] sm:$0xff] %vm556, %v546
  %612 = vst.msk [vmem:[%s3 + $0x1b8] sm:$0xff] %vm556, %v547
  %613 = vst.msk [vmem:[%s3 + $0x1c0] sm:$0xff] %vm556, %v548
  %614 = vst.msk [vmem:[%s3 + $0x1c8] sm:$0xff] %vm556, %v549
  %615 = vst.msk [vmem:[%s3 + $0x1d0] sm:$0xff] %vm556, %v550
  %616 = vst.msk [vmem:[%s3 + $0x1d8] sm:$0xff] %vm556, %v551
  %617 = vst.msk [vmem:[%s3 + $0x1e0] sm:$0xff] %vm556, %v552
  %618 = vst.msk [vmem:[%s3 + $0x1e8] sm:$0xff] %vm556, %v553
  %619 = vst.msk [vmem:[%s3 + $0x1f0] sm:$0xff] %vm556, %v554
  %620 = vst.msk [vmem:[%s3 + $0x1f8] sm:$0xff] %vm556, %v555
  // Predicated region
  $region14: #{tpu_custom_call.1} parent=0 // pred_check
    _
  $region15: #{tpu_custom_call.1} parent=0 // pred_check_branch
    %622 = sbr.rel (0) target = $region17
  $region16: #{tpu_custom_call.1} parent=0 // pred_region
    _
  $region17: #{tpu_custom_call.1} parent=0 // pred_fallthru
    _
  // Predicated region
  $region18: #{tpu_custom_call.1} parent=0 // pred_check
    _
  $region19: #{tpu_custom_call.1} parent=0 // pred_check_branch
    %624 = sbr.rel (0) target = $region21
  $region20: #{tpu_custom_call.1} parent=0 // pred_region
    _
  $region21: #{tpu_custom_call.1} parent=0 // pred_fallthru
    _

</llo_original>
